<compile_context>
chip_gen: v7x
topology: tpu7x:2x2x1
jax: 0.10.0
libtpu: 0.0.40
codegen_flags: <defaults>
</compile_context>

<pallas_src>
import jax
import jax.numpy as jnp
from jax.experimental import pallas as pl
from jax.experimental.pallas import tpu as pltpu


def projector_kernel(x_ref, w1_ref, g_ref, beta_ref, w2_ref, b2_ref, o_ref):
    # ---- Linear 1: (B, D) @ (D, H), f32 accumulation on the MXU ----
    # (Linear-1 bias intentionally omitted: cancelled by BN mean subtraction.)
    h = jnp.dot(x_ref[...], w1_ref[...], preferred_element_type=jnp.float32)

    # ---- BatchNorm1d (training mode, biased batch variance), single pass ----
    inv_n = 1.0 / h.shape[0]
    mean = jnp.sum(h, axis=0, keepdims=True) * inv_n            # (1, H)
    mean_sq = jnp.sum(h * h, axis=0, keepdims=True) * inv_n     # (1, H)
    var = mean_sq - mean * mean
    inv = jax.lax.rsqrt(var + 1e-5)
    scale = inv * g_ref[...].astype(jnp.float32)                # (1, H)
    shift = beta_ref[...].astype(jnp.float32) - mean * scale    # (1, H)
    h = h * scale + shift                                       # one FMA pass

    # ---- ReLU ----
    h = jnp.maximum(h, 0.0)

    # ---- Linear 2: (B, H) @ (H, P_pad) + (1, P_pad) ----
    out = jnp.dot(h.astype(w2_ref.dtype), w2_ref[...],
                  preferred_element_type=jnp.float32)
    out = out + b2_ref[...].astype(jnp.float32)
    o_ref[...] = out.astype(o_ref.dtype)


def projector(x, w1, b1, gamma, beta, w2, b2, *, out_dtype=jnp.float32):
    B, D = x.shape
    H = w1.shape[1]
    P = w2.shape[1]

    # b1 is accepted for API parity with the PyTorch module but is not used:
    # a Linear bias immediately followed by train-mode BatchNorm is exactly
    # cancelled by the batch-mean subtraction.
    del b1

    # Lane-dense output: pad projection dim up to a multiple of 128 so the
    # final store is an unmasked vst; slice the padding off afterwards.
    P_pad = ((P + 127) // 128) * 128
    if P_pad != P:
        w2 = jnp.pad(w2, ((0, 0), (0, P_pad - P)))
        b2 = jnp.pad(b2, ((0, 0), (0, P_pad - P)))

    def full_spec(shape):
        return pl.BlockSpec(shape, lambda *_: (0,) * len(shape))

    out_bytes = B * P_pad * jnp.dtype(out_dtype).itemsize
    cost = pl.CostEstimate(
        flops=2 * B * D * H + 2 * B * H * P_pad + 8 * B * H,
        transcendentals=H,  # rsqrt per hidden feature
        bytes_accessed=(x.nbytes + w1.nbytes + gamma.nbytes + beta.nbytes
                        + w2.nbytes + b2.nbytes + out_bytes),
    )

    out = pl.pallas_call(
        projector_kernel,
        out_shape=jax.ShapeDtypeStruct((B, P_pad), out_dtype),
        in_specs=[
            full_spec((B, D)),
            full_spec((D, H)),
            full_spec((1, H)),
            full_spec((1, H)),
            full_spec((H, P_pad)),
            full_spec((1, P_pad)),
        ],
        out_specs=full_spec((B, P_pad)),
        cost_estimate=cost,
    )(x, w1, gamma, beta, w2, b2)

    return out[:, :P] if P_pad != P else out


def projector_ref(x, w1, b1, gamma, beta, w2, b2):
    # Pure-JAX reference of the PyTorch forward (BatchNorm1d in training mode),
    # including the Linear-1 bias (verifies the kernel's cancellation invariant).
    # Matmul precision mirrors the kernel: storage-dtype operands, f32 accum.
    h = jnp.dot(x, w1, preferred_element_type=jnp.float32) + b1
    mean = jnp.mean(h, axis=0, keepdims=True)
    var = jnp.mean((h - mean) ** 2, axis=0, keepdims=True)
    h = (h - mean) * jax.lax.rsqrt(var + 1e-5) * gamma + beta
    h = jnp.maximum(h, 0.0)
    return jnp.dot(h.astype(w2.dtype), w2, preferred_element_type=jnp.float32) + b2


if __name__ == "__main__":
    # Small shapes consistent with the module: Projector(dim, projection_size, hidden)
    B, dim, hidden, proj = 8, 32, 128, 64

    key = jax.random.PRNGKey(0)
    kx, kw1, kb1, kw2, kb2 = jax.random.split(key, 5)

    # bf16 activations/weights (MXU fast path); BN params and biases in f32.
    x = jax.random.normal(kx, (B, dim), jnp.float32).astype(jnp.bfloat16)

    lim1 = 1.0 / (dim ** 0.5)
    w1 = jax.random.uniform(kw1, (dim, hidden), jnp.float32, -lim1, lim1).astype(jnp.bfloat16)
    b1 = jax.random.uniform(kb1, (1, hidden), jnp.float32, -lim1, lim1)
    gamma = jnp.ones((1, hidden), jnp.float32)    # BatchNorm1d weight
    beta = jnp.zeros((1, hidden), jnp.float32)    # BatchNorm1d bias
    lim2 = 1.0 / (hidden ** 0.5)
    w2 = jax.random.uniform(kw2, (hidden, proj), jnp.float32, -lim2, lim2).astype(jnp.bfloat16)
    b2 = jax.random.uniform(kb2, (1, proj), jnp.float32, -lim2, lim2)

    out = projector(x, w1, b1, gamma, beta, w2, b2)
    out = jax.block_until_ready(out)

    ref = projector_ref(x, w1, b1, gamma, beta, w2, b2)
    assert out.shape == (B, proj)
    max_err = float(jnp.max(jnp.abs(out - ref)))
    assert jnp.allclose(out, ref, atol=2e-2, rtol=2e-2), f"max abs err {max_err}"

    print("KERNEL_OK")
</pallas_src>

<mosaic_0001>
module attributes {stable_mosaic.version = 11 : i64} {
  func.func @projector_kernel(%arg0: memref<8x32xbf16, #tpu.memory_space<vmem>>, %arg1: memref<32x128xbf16, #tpu.memory_space<vmem>>, %arg2: memref<1x128xf32, #tpu.memory_space<vmem>>, %arg3: memref<1x128xf32, #tpu.memory_space<vmem>>, %arg4: memref<128x128xbf16, #tpu.memory_space<vmem>>, %arg5: memref<1x128xf32, #tpu.memory_space<vmem>>, %arg6: memref<8x128xf32, #tpu.memory_space<vmem>>) attributes {dimension_semantics = [], scalar_prefetch = 0 : i64, scratch_operands = 0 : i64, tpu.core_type = #tpu.core_type<tc>} {
    %c0 = arith.constant 0 : index
    %c0_0 = arith.constant 0 : index
    %0 = vector.load %arg0[%c0, %c0_0] : memref<8x32xbf16, #tpu.memory_space<vmem>>, vector<8x32xbf16>
    %c0_1 = arith.constant 0 : index
    %c0_2 = arith.constant 0 : index
    %1 = vector.load %arg1[%c0_1, %c0_2] : memref<32x128xbf16, #tpu.memory_space<vmem>>, vector<32x128xbf16>
    %cst = arith.constant dense<0.000000e+00> : vector<8x128xf32>
    %2 = tpu.matmul %0, %1, %cst {dimension_numbers = #tpu.dot_dimension_numbers<[1], [0], [0], [1], [0, 0, 1, 1], [], []>} : vector<8x32xbf16>, vector<32x128xbf16>, vector<8x128xf32> -> vector<8x128xf32>
    %cst_3 = arith.constant dense<0.000000e+00> : vector<128xf32>
    %3 = vector.multi_reduction <add>, %2, %cst_3 [0] : vector<8x128xf32> to vector<128xf32>
    %4 = vector.shape_cast %3 : vector<128xf32> to vector<1x128xf32>
    %cst_4 = arith.constant 1.250000e-01 : f32
    %5 = vector.broadcast %cst_4 : f32 to vector<1x128xf32>
    %6 = arith.mulf %4, %5 : vector<1x128xf32>
    %7 = arith.mulf %2, %2 : vector<8x128xf32>
    %cst_5 = arith.constant dense<0.000000e+00> : vector<128xf32>
    %8 = vector.multi_reduction <add>, %7, %cst_5 [0] : vector<8x128xf32> to vector<128xf32>
    %9 = vector.shape_cast %8 : vector<128xf32> to vector<1x128xf32>
    %cst_6 = arith.constant 1.250000e-01 : f32
    %10 = vector.broadcast %cst_6 : f32 to vector<1x128xf32>
    %11 = arith.mulf %9, %10 : vector<1x128xf32>
    %12 = arith.mulf %6, %6 : vector<1x128xf32>
    %13 = arith.subf %11, %12 : vector<1x128xf32>
    %cst_7 = arith.constant 9.99999974E-6 : f32
    %14 = vector.broadcast %cst_7 : f32 to vector<1x128xf32>
    %15 = arith.addf %13, %14 : vector<1x128xf32>
    %16 = math.rsqrt %15 : vector<1x128xf32>
    %c0_8 = arith.constant 0 : index
    %c0_9 = arith.constant 0 : index
    %17 = vector.load %arg2[%c0_8, %c0_9] : memref<1x128xf32, #tpu.memory_space<vmem>>, vector<1x128xf32>
    %18 = arith.mulf %16, %17 : vector<1x128xf32>
    %c0_10 = arith.constant 0 : index
    %c0_11 = arith.constant 0 : index
    %19 = vector.load %arg3[%c0_10, %c0_11] : memref<1x128xf32, #tpu.memory_space<vmem>>, vector<1x128xf32>
    %20 = arith.mulf %6, %18 : vector<1x128xf32>
    %21 = arith.subf %19, %20 : vector<1x128xf32>
    %22 = vector.broadcast %18 : vector<1x128xf32> to vector<8x128xf32>
    %23 = arith.mulf %2, %22 : vector<8x128xf32>
    %24 = vector.broadcast %21 : vector<1x128xf32> to vector<8x128xf32>
    %25 = arith.addf %23, %24 : vector<8x128xf32>
    %cst_12 = arith.constant 0.000000e+00 : f32
    %26 = vector.broadcast %cst_12 : f32 to vector<8x128xf32>
    %27 = arith.maximumf %25, %26 : vector<8x128xf32>
    %28 = arith.truncf %27 : vector<8x128xf32> to vector<8x128xbf16>
    %c0_13 = arith.constant 0 : index
    %c0_14 = arith.constant 0 : index
    %29 = vector.load %arg4[%c0_13, %c0_14] : memref<128x128xbf16, #tpu.memory_space<vmem>>, vector<128x128xbf16>
    %cst_15 = arith.constant dense<0.000000e+00> : vector<8x128xf32>
    %30 = tpu.matmul %28, %29, %cst_15 {dimension_numbers = #tpu.dot_dimension_numbers<[1], [0], [0], [1], [0, 0, 1, 1], [], []>} : vector<8x128xbf16>, vector<128x128xbf16>, vector<8x128xf32> -> vector<8x128xf32>
    %c0_16 = arith.constant 0 : index
    %c0_17 = arith.constant 0 : index
    %31 = vector.load %arg5[%c0_16, %c0_17] : memref<1x128xf32, #tpu.memory_space<vmem>>, vector<1x128xf32>
    %32 = vector.broadcast %31 : vector<1x128xf32> to vector<8x128xf32>
    %33 = arith.addf %30, %32 : vector<8x128xf32>
    %c0_18 = arith.constant 0 : index
    %c0_19 = arith.constant 0 : index
    %34 = vector.load %arg6[%c0_18, %c0_19] : memref<8x128xf32, #tpu.memory_space<vmem>>, vector<8x128xf32>
    tpu.vector_store %arg6[%c0_18, %c0_19], %33 {strides = array<i32>} : memref<8x128xf32, #tpu.memory_space<vmem>>, vector<8x128xf32>,
    return
  }
}

</mosaic_0001>

<llo_original>
// kernel: tpu_custom_call.1
$region0: #{tpu_custom_call.1}
  #allocation0 [shape = 'u32[]', space=smem, size = 0x4, offset = 0x4, fixed_abs, tag = 'smem constant byte address 0x4 - core index']
  #allocation1 [shape = 'u32[144,128]{1,0:T(1,128)}', space=vmem, size = 0x12000, scoped, tag = 'internal scratch']
  %s0 = inlined_call_operand.hbm [shape: bf16[8,32], index: 0, kind: input, shape index: {}]
  %s1 = inlined_call_operand.hbm [shape: bf16[32,128], index: 1, kind: input, shape index: {}]
  %s2 = inlined_call_operand.vmem [shape: f32[1,128], index: 2, kind: input, shape index: {}]
  %s3 = inlined_call_operand.vmem [shape: f32[1,128], index: 3, kind: input, shape index: {}]
  %s4 = inlined_call_operand.hbm [shape: bf16[128,128], index: 4, kind: input, shape index: {}]
  %s5 = inlined_call_operand.vmem [shape: f32[1,128], index: 5, kind: input, shape index: {}]
  %s6 = inlined_call_operand.hbm [shape: f32[8,128], index: 6, kind: output, shape index: {}]
  %s7 = sld [smem:[#allocation0]]
  $region46: #{tpu_custom_call.1} parent=0
    _
  %s9 = ssub.s32 1, %s7
  %s10 = scalar_select 0, %s9, %s7
  $region1: #{tpu_custom_call.1} parent=0
    #allocation2 [shape = 'u8[2048]{0}', space=vmem, size = 0x800, scoped, tag = 'input window, operand 0, single buffered']
    #allocation3 [shape = 's32[1]{0}', space=sflag, size = 0x4, scoped, tag = 'scoped memory for tpu_custom_call.1']
    #allocation4 [shape = 's32[1]{0}', space=sflag, size = 0x4, scoped, tag = 'scoped memory for tpu_custom_call.1']
    #allocation5 [shape = 'u8[8192]{0}', space=vmem, size = 0x2000, scoped, tag = 'input window, operand 1, single buffered']
    #allocation6 [shape = 's32[1]{0}', space=sflag, size = 0x4, scoped, tag = 'scoped memory for tpu_custom_call.1']
    #allocation7 [shape = 'u8[32768]{0}', space=vmem, size = 0x8000, scoped, tag = 'input window, operand 4, single buffered']
    #allocation8 [shape = 'u8[4096]{0}', space=vmem, size = 0x1000, scoped, tag = 'output window, operand 0, single buffered']
    %11 = vsyncpa [#allocation3], 0
    %12 = vsyncpa [#allocation6], 0
    %13 = vsyncpa [#allocation4], 0
    // Predicated region
    $region2: #{tpu_custom_call.1} parent=1 // pred_check
      _
    $region3: #{tpu_custom_call.1} parent=1 // pred_check_branch
      %15 = sbr.rel (0) target = $region5
    $region4: #{tpu_custom_call.1} parent=1 // pred_region
      %s17 = ssub.s32 64, 64
      %18 = vsyncadd [#allocation3], %s17
      %s20 = sshll.u32 [#allocation2], 4
      %s21 = int_to_ptr.vmem [resolvable:$true] %s20
      %23 = dma.hbm_to_vmem [thread:$0]  %s0, 64, %s21, [#allocation3]
    $region5: #{tpu_custom_call.1} parent=1 // pred_fallthru
      _
    // Predicated region
    $region6: #{tpu_custom_call.1} parent=1 // pred_check
      _
    $region7: #{tpu_custom_call.1} parent=1 // pred_check_branch
      %25 = sbr.rel (0) target = $region9
    $region8: #{tpu_custom_call.1} parent=1 // pred_region
      %s27 = ssub.s32 256, 256
      %28 = vsyncadd [#allocation6], %s27
      %s29 = sshll.u32 [#allocation5], 4
      %s30 = int_to_ptr.vmem [resolvable:$true] %s29
      %35 = dma.hbm_to_vmem [thread:$0]  %s1, 256, %s30, [#allocation6], 64, 64, 4
    $region9: #{tpu_custom_call.1} parent=1 // pred_fallthru
      _
    // Predicated region
    $region10: #{tpu_custom_call.1} parent=1 // pred_check
      _
    $region11: #{tpu_custom_call.1} parent=1 // pred_check_branch
      %37 = sbr.rel (0) target = $region13
    $region12: #{tpu_custom_call.1} parent=1 // pred_region
      _
    $region13: #{tpu_custom_call.1} parent=1 // pred_fallthru
      _
    // Predicated region
    $region14: #{tpu_custom_call.1} parent=1 // pred_check
      _
    $region15: #{tpu_custom_call.1} parent=1 // pred_check_branch
      %39 = sbr.rel (0) target = $region17
    $region16: #{tpu_custom_call.1} parent=1 // pred_region
      _
    $region17: #{tpu_custom_call.1} parent=1 // pred_fallthru
      _
    // Predicated region
    $region18: #{tpu_custom_call.1} parent=1 // pred_check
      _
    $region19: #{tpu_custom_call.1} parent=1 // pred_check_branch
      %41 = sbr.rel (0) target = $region21
    $region20: #{tpu_custom_call.1} parent=1 // pred_region
      %s43 = ssub.s32 1024, 1024
      %44 = vsyncadd [#allocation6], %s43
      %s45 = sshll.u32 [#allocation7], 4
      %s46 = int_to_ptr.vmem [resolvable:$true] %s45
      %51 = dma.hbm_to_vmem [thread:$0]  %s4, 1024, %s46, [#allocation6], 64, 64, 4
    $region21: #{tpu_custom_call.1} parent=1 // pred_fallthru
      _
    // Predicated region
    $region22: #{tpu_custom_call.1} parent=1 // pred_check
      _
    $region23: #{tpu_custom_call.1} parent=1 // pred_check_branch
      %53 = sbr.rel (0) target = $region25
    $region24: #{tpu_custom_call.1} parent=1 // pred_region
      _
    $region25: #{tpu_custom_call.1} parent=1 // pred_fallthru
      _
    // Predicated region
    $region26: #{tpu_custom_call.1} parent=1 // pred_check
      _
    $region27: #{tpu_custom_call.1} parent=1 // pred_check_branch
      %55 = sbr.rel (0) target = $region29
    $region28: #{tpu_custom_call.1} parent=1 // pred_region
      %56 = dma.done [#allocation3], 64
    $region29: #{tpu_custom_call.1} parent=1 // pred_fallthru
      _
    // Predicated region
    $region30: #{tpu_custom_call.1} parent=1 // pred_check
      _
    $region31: #{tpu_custom_call.1} parent=1 // pred_check_branch
      %58 = sbr.rel (0) target = $region33
    $region32: #{tpu_custom_call.1} parent=1 // pred_region
      %59 = dma.done [#allocation6], 256
    $region33: #{tpu_custom_call.1} parent=1 // pred_fallthru
      _
    // Predicated region
    $region34: #{tpu_custom_call.1} parent=1 // pred_check
      _
    $region35: #{tpu_custom_call.1} parent=1 // pred_check_branch
      %61 = sbr.rel (0) target = $region37
    $region36: #{tpu_custom_call.1} parent=1 // pred_region
      %62 = dma.done [#allocation6], 1024
    $region37: #{tpu_custom_call.1} parent=1 // pred_fallthru
      _
    %v64 = vld [vmem:[#allocation2] sm:$0xf]
    %v65 = vld [vmem:[#allocation5] sm:$0xf]
    %v66 = vld [vmem:[#allocation5 + $0x4] sm:$0xf]
    %v67 = vld [vmem:[#allocation5 + $0x8] sm:$0xf]
    %v68 = vld [vmem:[#allocation5 + $0xc] sm:$0xf]
    %v73 = vunpack.c.l.b16 %v65
    %v74 = vunpack.c.l.b16 %v66
    %v75 = vunpack.c.l.b16 %v67
    %v76 = vunpack.c.l.b16 %v68
    %v77 = vpack.c.b16 %v74, %v73
    %v78 = vpack.c.b16 %v76, %v75
    %vm81 = vcmask 261120
    %v83 = vsel %vm81, %v64, 0
    %85 = vmatprep.subr.bf16.mxu0 0
    %86 = vmatpush1.bf16.msra.mxu0 %v77
    %87 = vmatprep.subr.bf16.mxu0 0
    %88 = vmatpush1.bf16.msra.mxu0 %v78
    %89 = vmatprep.subr.bf16.mxu0 0
    %90 = vmatpush1.bf16.msra.mxu0 0
    %91 = vmatprep.subr.bf16.mxu0 0
    %92 = vmatpush1.bf16.msra.mxu0 0
    %93 = vmatprep.subr.bf16.mxu0 0
    %94 = vmatpush1.bf16.msra.mxu0 0
    %95 = vmatprep.subr.bf16.mxu0 0
    %96 = vmatpush1.bf16.msra.mxu0 0
    %97 = vmatprep.subr.bf16.mxu0 0
    %98 = vmatpush1.bf16.msra.mxu0 0
    %99 = vmatprep.subr.bf16.mxu0 0
    %100 = vmatpush1.bf16.msra.mxu0 0
    %101 = vmatprep.subr.bf16.mxu0 0
    %102 = vmatpush1.bf16.msra.mxu0 0
    %103 = vmatprep.subr.bf16.mxu0 0
    %104 = vmatpush1.bf16.msra.mxu0 0
    %105 = vmatprep.subr.bf16.mxu0 0
    %106 = vmatpush1.bf16.msra.mxu0 0
    %107 = vmatprep.subr.bf16.mxu0 0
    %108 = vmatpush1.bf16.msra.mxu0 0
    %109 = vmatprep.subr.bf16.mxu0 0
    %110 = vmatpush1.bf16.msra.mxu0 0
    %111 = vmatprep.subr.bf16.mxu0 0
    %112 = vmatpush1.bf16.msra.mxu0 0
    %113 = vmatprep.subr.bf16.mxu0 0
    %114 = vmatpush1.bf16.msra.mxu0 0
    %115 = vmatprep.subr.bf16.mxu0 0
    %116 = vmatpush1.bf16.msra.mxu0 0
    %117 = vmatprep.mubr.bf16.mxu0 0
    %118 = vmatmul.mubr.bf16.gmra.mrb[0].mxu0 %v83
    %v119 = vpop.f32.mrb[0].mxu0
    %v120 = vadd.f32 0.0, %v119
    %v121 = vpop.f32.mrb[0].mxu0
    %v122 = vpop.f32.mrb[0].mxu0
    %v123 = vpop.f32.mrb[0].mxu0
    %124 = vdwg.mxu0
    %v125 = vrot.slane %v120, 4
    %v126 = vadd.f32 %v120, %v125
    %v127 = vrot.slane %v126, 2
    %v128 = vadd.f32 %v126, %v127
    %v129 = vrot.slane %v128, 1
    %v130 = vadd.f32 %v128, %v129
    %v131 = vmul.f32 %v130, 0.125
    %v132 = vmul.f32 %v120, %v120
    %v133 = vrot.slane %v132, 4
    %v134 = vadd.f32 %v132, %v133
    %v135 = vrot.slane %v134, 2
    %v136 = vadd.f32 %v134, %v135
    %v137 = vrot.slane %v136, 1
    %v138 = vadd.f32 %v136, %v137
    %v139 = vmul.f32 %v138, 0.125
    %v140 = vmul.f32 %v131, %v131
    %v141 = vsub.f32 %v139, %v140
    %v142 = vadd.f32 %v141, 1e-05
    %v143 = vrsqrt.pop %v142
    %v144 = vld [vmem:[%s2] sm:$0x1]
    %v145 = vmul.f32 %v143, %v144
    %v146 = vld [vmem:[%s3] sm:$0x1]
    %v147 = vmul.f32 %v131, %v145
    %v148 = vsub.f32 %v146, %v147
    %v149 = vlaneseq
    %v150 = vshrl.u32 %v149, 7
    %v151 = vsub.s32 0, %v150
    %v152 = vrot.slane %v145, %v151
    %v153 = vmul.f32 %v120, %v152
    %v155 = vlaneseq
    %v156 = vshrl.u32 %v155, 7
    %v157 = vsub.s32 0, %v156
    %v158 = vrot.slane %v148, %v157
    %v160 = vadd.f32 %v153, %v158
    %v161 = vmax.f32 %v160, 0.0
    %v162 = vpack.c.bf16 %v161, %v161
    %v163 = vld [vmem:[#allocation7] sm:$0xf]
    %v164 = vld [vmem:[#allocation7 + $0x4] sm:$0xf]
    %v165 = vld [vmem:[#allocation7 + $0x8] sm:$0xf]
    %v166 = vld [vmem:[#allocation7 + $0xc] sm:$0xf]
    %v167 = vld [vmem:[#allocation7 + $0x10] sm:$0xf]
    %v168 = vld [vmem:[#allocation7 + $0x14] sm:$0xf]
    %v169 = vld [vmem:[#allocation7 + $0x18] sm:$0xf]
    %v170 = vld [vmem:[#allocation7 + $0x1c] sm:$0xf]
    %v171 = vld [vmem:[#allocation7 + $0x20] sm:$0xf]
    %v172 = vld [vmem:[#allocation7 + $0x24] sm:$0xf]
    %v173 = vld [vmem:[#allocation7 + $0x28] sm:$0xf]
    %v174 = vld [vmem:[#allocation7 + $0x2c] sm:$0xf]
    %v175 = vld [vmem:[#allocation7 + $0x30] sm:$0xf]
    %v176 = vld [vmem:[#allocation7 + $0x34] sm:$0xf]
    %v177 = vld [vmem:[#allocation7 + $0x38] sm:$0xf]
    %v178 = vld [vmem:[#allocation7 + $0x3c] sm:$0xf]
    %v179 = vld [vmem:[%s5] sm:$0x1]
    %v181 = vlaneseq
    %v182 = vshrl.u32 %v181, 7
    %v183 = vsub.s32 0, %v182
    %v184 = vrot.slane %v179, %v183
    %v202 = vunpack.c.l.b16 %v163
    %v203 = vunpack.c.l.b16 %v164
    %v204 = vunpack.c.l.b16 %v165
    %v205 = vunpack.c.l.b16 %v166
    %v206 = vunpack.c.l.b16 %v167
    %v207 = vunpack.c.l.b16 %v168
    %v208 = vunpack.c.l.b16 %v169
    %v209 = vunpack.c.l.b16 %v170
    %v210 = vunpack.c.l.b16 %v171
    %v211 = vunpack.c.l.b16 %v172
    %v212 = vunpack.c.l.b16 %v173
    %v213 = vunpack.c.l.b16 %v174
    %v214 = vunpack.c.l.b16 %v175
    %v215 = vunpack.c.l.b16 %v176
    %v216 = vunpack.c.l.b16 %v177
    %v217 = vunpack.c.l.b16 %v178
    %v218 = vpack.c.b16 %v203, %v202
    %v219 = vpack.c.b16 %v205, %v204
    %v220 = vpack.c.b16 %v207, %v206
    %v221 = vpack.c.b16 %v209, %v208
    %v222 = vpack.c.b16 %v211, %v210
    %v223 = vpack.c.b16 %v213, %v212
    %v224 = vpack.c.b16 %v215, %v214
    %v225 = vpack.c.b16 %v217, %v216
    %234 = vmatprep.subr.bf16.mxu0 0
    %235 = vmatpush1.bf16.msra.mxu0 %v218
    %236 = vmatprep.subr.bf16.mxu0 0
    %237 = vmatpush1.bf16.msra.mxu0 %v219
    %238 = vmatprep.subr.bf16.mxu0 0
    %239 = vmatpush1.bf16.msra.mxu0 %v220
    %240 = vmatprep.subr.bf16.mxu0 0
    %241 = vmatpush1.bf16.msra.mxu0 %v221
    %242 = vmatprep.subr.bf16.mxu0 0
    %243 = vmatpush1.bf16.msra.mxu0 %v222
    %244 = vmatprep.subr.bf16.mxu0 0
    %245 = vmatpush1.bf16.msra.mxu0 %v223
    %246 = vmatprep.subr.bf16.mxu0 0
    %247 = vmatpush1.bf16.msra.mxu0 %v224
    %248 = vmatprep.subr.bf16.mxu0 0
    %249 = vmatpush1.bf16.msra.mxu0 %v225
    %250 = vmatprep.subr.bf16.mxu0 0
    %251 = vmatpush1.bf16.msra.mxu0 0
    %252 = vmatprep.subr.bf16.mxu0 0
    %253 = vmatpush1.bf16.msra.mxu0 0
    %254 = vmatprep.subr.bf16.mxu0 0
    %255 = vmatpush1.bf16.msra.mxu0 0
    %256 = vmatprep.subr.bf16.mxu0 0
    %257 = vmatpush1.bf16.msra.mxu0 0
    %258 = vmatprep.subr.bf16.mxu0 0
    %259 = vmatpush1.bf16.msra.mxu0 0
    %260 = vmatprep.subr.bf16.mxu0 0
    %261 = vmatpush1.bf16.msra.mxu0 0
    %262 = vmatprep.subr.bf16.mxu0 0
    %263 = vmatpush1.bf16.msra.mxu0 0
    %264 = vmatprep.subr.bf16.mxu0 0
    %265 = vmatpush1.bf16.msra.mxu0 0
    %266 = vmatprep.mubr.bf16.mxu0 0
    %267 = vmatmul.mubr.bf16.gmra.mrb[0].mxu0 %v162
    %v268 = vpop.f32.mrb[0].mxu0
    %v269 = vadd.f32 %v184, %v268
    %v270 = vpop.f32.mrb[0].mxu0
    %v271 = vpop.f32.mrb[0].mxu0
    %v272 = vpop.f32.mrb[0].mxu0
    %273 = vdwg.mxu0
    %274 = vst [vmem:[#allocation8] sm:$0xff] %v269
    // Predicated region
    $region38: #{tpu_custom_call.1} parent=1 // pred_check
      _
    $region39: #{tpu_custom_call.1} parent=1 // pred_check_branch
      %276 = sbr.rel (0) target = $region41
    $region40: #{tpu_custom_call.1} parent=1 // pred_region
      %s278 = ssub.s32 128, 128
      %279 = vsyncadd [#allocation4], %s278
      %s281 = sshll.u32 [#allocation8], 4
      %s282 = int_to_ptr.vmem [resolvable:$true] %s281
      %284 = dma.vmem_to_hbm [thread:$0]  %s282, 128, %s6, [#allocation4]
    $region41: #{tpu_custom_call.1} parent=1 // pred_fallthru
      _
    // Predicated region
    $region42: #{tpu_custom_call.1} parent=1 // pred_check
      _
    $region43: #{tpu_custom_call.1} parent=1 // pred_check_branch
      %286 = sbr.rel (0) target = $region45
    $region44: #{tpu_custom_call.1} parent=1 // pred_region
      %287 = dma.done [#allocation4], 128
    $region45: #{tpu_custom_call.1} parent=1 // pred_fallthru
      _
    %288 = vsyncpa [#allocation3], 1
    %289 = vsyncpa [#allocation6], 1
    %290 = vsyncpa [#allocation4], 1

</llo_original>
